<compile_context>
chip_gen: v7x
topology: tpu7x:2x2x1
jax: 0.10.0
libtpu: 0.0.40
codegen_flags: <defaults>
</compile_context>

<pallas_src>
import jax
import jax.numpy as jnp
import numpy as np
from jax.experimental import pallas as pl
from jax.experimental.pallas import tpu as pltpu

IGNORE_LABEL = 255
DELTA = 0.5
AUX_WEIGHTS = (1.0, 0.4, 0.4)
# Deterministic "parameter" from Dice.__init__ (num_classes = 20).
CLASS_WEIGHT = jnp.array(
    [2, 1, 1, 2, 2, 2, 1, 3, 2, 10, 15, 1, 1, 1, 1, 4, 1, 1, 10, 1],
    dtype=jnp.float32,
)

_LANE = 128
_MAX_CHUNK = 4096                 # review: cap spatial chunk at 2-4K lanes
_VMEM_BUDGET = 12 * 1024 * 1024   # conservative; fits v7x 32 MiB scoped VMEM
_EPS = 1e-6


def _pick_chunk(hw, num_heads, num_classes, itemsize, lab_itemsize):
    """Largest lane-aligned spatial chunk whose steady-state VMEM footprint
    (triple-buffered native-dtype pred blocks + labels + an estimate of the
    (1+heads) f32 (C,chunk) in-kernel temporaries) fits the budget, capped at
    _MAX_CHUNK.  Prefer a chunk that divides HW so no tail masking is needed."""
    per_lane = (3 * num_heads * num_classes * itemsize     # pred blocks (Buffered(3))
                + 3 * lab_itemsize                          # labels blocks
                + (1 + num_heads) * num_classes * 4)        # f32/bf16 temporaries
    max_chunk = _VMEM_BUDGET // per_lane
    max_chunk = min(_MAX_CHUNK, max(_LANE, (max_chunk // _LANE) * _LANE))
    if hw <= max_chunk:
        return hw
    for c in range(max_chunk, _LANE - 1, -_LANE):
        if hw % c == 0:
            return c
    return max_chunk  # tail chunk handled with in-kernel masking


def _bf16_vpu_ok():
    """bf16-native VPU exists on v6e / v7x; v5e and older keep f32 math."""
    try:
        kind = jax.devices()[0].device_kind.lower()
    except Exception:
        return False
    if any(t in kind for t in ("v2", "v3", "v4", "v5")):
        return False
    return any(t in kind for t in ("v6", "v7", "7x"))


def _spec(shape, index_map, bufs=None):
    """BlockSpec with optional deeper pipelining (falls back if unsupported)."""
    if bufs is not None and hasattr(pl, "Buffered"):
        try:
            return pl.BlockSpec(shape, index_map, pipeline_mode=pl.Buffered(bufs))
        except TypeError:
            pass
    return pl.BlockSpec(shape, index_map)


def _make_dice_kernel(num_heads, num_classes, chunk, hw, cps, ignore_label,
                      compute_dtype, need_tail_mask):
    C = num_classes

    def kernel(labels_ref, *refs):
        pred_refs = refs[:num_heads]
        outs = refs[num_heads:num_heads + 1 + 2 * num_heads]
        lab_out = outs[0]
        tp_outs = outs[1:1 + num_heads]
        sp_outs = outs[1 + num_heads:]
        scratch = refs[num_heads + 1 + 2 * num_heads:]
        lab_acc = scratch[0]                       # (C, 1) f32 (shared)
        tp_acc = scratch[1:1 + num_heads]          # num_heads x (C, 1) f32
        sp_acc = scratch[1 + num_heads:]           # num_heads x (C, 1) f32

        h = pl.program_id(2)
        nh = pl.num_programs(2)

        @pl.when(h == 0)
        def _init():
            lab_acc[...] = jnp.zeros_like(lab_acc)
            for i in range(num_heads):
                tp_acc[i][...] = jnp.zeros_like(tp_acc[i])
                sp_acc[i][...] = jnp.zeros_like(sp_acc[i])

        labels = labels_ref[0].astype(jnp.int32)              # (1, chunk)
        invalid = labels == ignore_label                      # ignored pixels
        if need_tail_mask:
            # Fold the tail mask (block overhangs HW) into the same mask.
            s = pl.program_id(1)
            lane = jax.lax.broadcasted_iota(jnp.int32, (1, chunk), 1)
            pos = (s * cps + h) * chunk + lane                 # global pixel idx
            invalid = jnp.logical_or(invalid, pos >= hw)

        # Fold masks into the label remap: -1 never matches a class id.
        lab = jnp.where(invalid, -1, labels)
        cls_ids = jax.lax.broadcasted_iota(jnp.int32, (C, chunk), 0)
        one = jnp.full((), 1, compute_dtype)
        zero = jnp.full((), 0, compute_dtype)
        one_hot = jnp.where(cls_ids == lab, one, zero)         # (C, chunk)
        # Hoist the sublane broadcast of the valid mask once (reused per head).
        valid_c = jnp.broadcast_to(jnp.logical_not(invalid), (C, chunk))

        lab_acc[...] += jnp.sum(one_hot, axis=-1, keepdims=True,
                                dtype=jnp.float32)

        for i in range(num_heads):
            p = pred_refs[i][0].astype(compute_dtype)          # (C, chunk)
            pm = jnp.where(valid_c, p, zero)                   # NaN-safe masking
            tp_acc[i][...] += jnp.sum(one_hot * pm, axis=-1, keepdims=True,
                                      dtype=jnp.float32)
            sp_acc[i][...] += jnp.sum(pm, axis=-1, keepdims=True,
                                      dtype=jnp.float32)

        @pl.when(h == nh - 1)
        def _finalize():
            lab_out[0, 0] = lab_acc[...]
            for i in range(num_heads):
                tp_outs[i][0, 0] = tp_acc[i][...]
                sp_outs[i][0, 0] = sp_acc[i][...]

    return kernel


def _dice_sums(preds_list, labels, *, ignore_label):
    """Fused Pallas pass over all heads.  Returns per-image per-class sums:
    label counts (B, C), true positives (B, heads, C), pred sums (B, heads, C)."""
    num_heads = len(preds_list)
    B, C, H, W = preds_list[0].shape
    HW = H * W

    preds_r = [p.reshape(B, C, HW) for p in preds_list]        # native dtype
    # Shrink the label stream; int16 is enough for class ids + ignore label.
    lab_dtype = jnp.int16 if max(ignore_label, C) < 2 ** 15 else jnp.int32
    labels_r = labels.reshape(B, 1, HW).astype(lab_dtype)

    itemsize = max(jnp.dtype(p.dtype).itemsize for p in preds_r)
    chunk = _pick_chunk(HW, num_heads, C, itemsize,
                        jnp.dtype(lab_dtype).itemsize)
    num_chunks = -(-HW // chunk)
    need_tail = (HW % chunk) != 0

    # v7x has two TensorCores sharing HBM; the batch axis alone only feeds
    # both when B is even.  For odd / single-image batches split the (assoc.)
    # HW reduction in two and combine the partial sums in the wrapper.
    splits = 2 if (B % 2 == 1 and num_chunks >= 2 and num_chunks % 2 == 0) else 1
    cps = num_chunks // splits

    # bf16 per-chunk math on bf16-native VPUs (products vs 0/1 masks are exact
    # in bf16); keep f32 math on v5e/older or for f32 inputs.  Accum is f32.
    if _bf16_vpu_ok() and all(p.dtype == jnp.bfloat16 for p in preds_r):
        compute_dtype = jnp.bfloat16
    else:
        compute_dtype = jnp.float32

    kernel = _make_dice_kernel(num_heads, C, chunk, HW, cps, ignore_label,
                               compute_dtype, need_tail)

    def in_idx(b, s, h):
        return (b, 0, s * cps + h)

    def out_idx(b, s, h):
        return (b, s, 0, 0)

    bufs = 3 if cps >= 3 else None    # deeper pipeline once chunks are many
    in_specs = ([_spec((1, 1, chunk), in_idx, bufs)]
                + [_spec((1, C, chunk), in_idx, bufs) for _ in range(num_heads)])

    n_out = 1 + 2 * num_heads
    out_specs = tuple(pl.BlockSpec((1, 1, C, 1), out_idx) for _ in range(n_out))
    out_shape = tuple(jax.ShapeDtypeStruct((B, splits, C, 1), jnp.float32)
                      for _ in range(n_out))
    scratch = [pltpu.VMEM((C, 1), jnp.float32) for _ in range(n_out)]

    outs = pl.pallas_call(
        kernel,
        out_shape=out_shape,
        grid_spec=pltpu.PrefetchScalarGridSpec(
            num_scalar_prefetch=0,
            grid=(B, splits, cps),
            in_specs=in_specs,
            out_specs=out_specs,
            scratch_shapes=scratch,
        ),
        compiler_params=pltpu.CompilerParams(
            dimension_semantics=("parallel", "parallel", "arbitrary"),
            vmem_limit_bytes=32 * 1024 * 1024,
        ),
    )(labels_r, *preds_r)

    def red(o):                        # (B, S, C, 1) -> (B, C), combine splits
        return jnp.sum(o[..., 0], axis=1)

    lab_sum = red(outs[0])
    tp = jnp.stack([red(o) for o in outs[1:1 + num_heads]], axis=1)
    sp = jnp.stack([red(o) for o in outs[1 + num_heads:]], axis=1)
    return lab_sum, tp, sp


def dice_loss(preds, targets, weight=CLASS_WEIGHT, *, ignore_label=IGNORE_LABEL,
              delta=DELTA, aux_weights=AUX_WEIGHTS):
    """Mirrors Dice.forward: preds is a single (B,C,H,W) array or a tuple of heads."""
    if isinstance(preds, tuple):
        n = min(len(preds), len(aux_weights))     # matches zip() truncation
        preds_list = list(preds[:n])
        head_w = tuple(float(aux_weights[i]) for i in range(n))
    else:
        preds_list = [preds]
        head_w = (1.0,)

    num_classes = preds_list[0].shape[1]
    lab_sum, tp, sp = _dice_sums(preds_list, targets, ignore_label=ignore_label)

    # Tiny nonlinear finalize on (B, heads, C) arrays (done in the wrapper).
    # fn = lab_sum - tp, fp = sp - tp  =>  tp + d*fn + (1-d)*fp = d*lab + (1-d)*sp
    w = jnp.asarray(weight, jnp.float32).reshape(1, 1, num_classes)
    denom = delta * lab_sum[:, None, :] + (1.0 - delta) * sp + _EPS
    dice = (tp + _EPS) / denom * w                           # (B, heads, C)
    head_loss = jnp.sum(1.0 - dice, axis=-1) / num_classes   # (B, heads)
    per_head = jnp.mean(head_loss, axis=0)                   # (heads,)
    return jnp.sum(per_head * jnp.asarray(head_w, jnp.float32))


def dice_ref(preds, labels, weight, *, ignore_label=IGNORE_LABEL, delta=DELTA):
    """Pure-JAX reference matching the PyTorch semantics exactly."""
    num_classes = preds.shape[1]
    ignore_mask = labels == ignore_label
    lab = jnp.where(ignore_mask, 0, labels)
    one_hot = jax.nn.one_hot(lab, num_classes, axis=1, dtype=jnp.float32)
    mask = (~ignore_mask)[:, None].astype(jnp.float32)
    labels_oh = one_hot * mask
    p = preds.astype(jnp.float32) * mask
    tp = jnp.sum(labels_oh * p, axis=(2, 3))
    fn = jnp.sum(labels_oh * (1.0 - p), axis=(2, 3))
    fp = jnp.sum((1.0 - labels_oh) * p, axis=(2, 3))
    dice = (tp + 1e-6) / (tp + delta * fn + (1 - delta) * fp + 1e-6)
    dice = dice * weight[None, :]
    dice = jnp.sum(1.0 - dice, axis=-1) / num_classes
    return dice.mean()


if __name__ == "__main__":
    key = jax.random.PRNGKey(0)
    keys = jax.random.split(key, 8)

    C = 20   # matches the fixed class-weight vector from Dice.__init__

    def make_case(kp, kl, B, H, W, dtype):
        p = jax.random.uniform(kp, (B, C, H, W), dtype=jnp.float32)
        if dtype != jnp.float32:
            p = p.astype(dtype)
        lab = jax.random.randint(kl, (B, H, W), 0, C, dtype=jnp.int32)
        lab = lab.at[:, :2, :].set(IGNORE_LABEL)          # some ignored pixels
        return p, lab

    # 1) single head, bf16 preds (native-dtype streaming path)
    p1, l1 = make_case(keys[0], keys[1], 2, 16, 16, jnp.bfloat16)
    out = jax.block_until_ready(dice_loss(p1, l1))
    ref = dice_ref(p1, l1, CLASS_WEIGHT)
    np.testing.assert_allclose(np.asarray(out), np.asarray(ref),
                               rtol=2e-4, atol=2e-4)

    # 2) aux-heads tuple path (all heads fused into ONE pallas_call)
    a1 = jax.random.uniform(keys[2], (2, C, 16, 16),
                            dtype=jnp.float32).astype(jnp.bfloat16)
    a2 = jax.random.uniform(keys[3], (2, C, 16, 16),
                            dtype=jnp.float32).astype(jnp.bfloat16)
    tup = (p1, a1, a2)
    out = jax.block_until_ready(dice_loss(tup, l1))
    ref = sum(w * dice_ref(p, l1, CLASS_WEIGHT) for p, w in zip(tup, AUX_WEIGHTS))
    np.testing.assert_allclose(np.asarray(out), np.asarray(ref),
                               rtol=2e-4, atol=2e-4)

    # 3) odd batch + non-dividing spatial size: exercises the 2-way HW split
    #    (dual-TensorCore path) and the tail-chunk masking.
    p3, l3 = make_case(keys[4], keys[5], 1, 66, 66, jnp.bfloat16)
    out = jax.block_until_ready(dice_loss(p3, l3))
    ref = dice_ref(p3, l3, CLASS_WEIGHT)
    np.testing.assert_allclose(np.asarray(out), np.asarray(ref),
                               rtol=2e-4, atol=2e-4)

    # 4) f32 preds with several chunks: exercises the f32 compute path and the
    #    Buffered(3) input pipeline.
    p4, l4 = make_case(keys[6], keys[7], 2, 128, 128, jnp.float32)
    out = jax.block_until_ready(dice_loss(p4, l4))
    ref = dice_ref(p4, l4, CLASS_WEIGHT)
    np.testing.assert_allclose(np.asarray(out), np.asarray(ref),
                               rtol=2e-4, atol=2e-4)

    print("KERNEL_OK")
</pallas_src>

<mosaic_0001>
module attributes {stable_mosaic.version = 11 : i64} {
  func.func @kernel(%arg0: i32, %arg1: i32, %arg2: i32, %arg3: memref<1x1x256xi16, #tpu.memory_space<vmem>>, %arg4: memref<1x20x256xbf16, #tpu.memory_space<vmem>>, %arg5: memref<1x1x20x1xf32, #tpu.memory_space<vmem>>, %arg6: memref<1x1x20x1xf32, #tpu.memory_space<vmem>>, %arg7: memref<1x1x20x1xf32, #tpu.memory_space<vmem>>, %arg8: memref<20x1xf32, #tpu.memory_space<vmem>>, %arg9: memref<20x1xf32, #tpu.memory_space<vmem>>, %arg10: memref<20x1xf32, #tpu.memory_space<vmem>>) attributes {dimension_semantics = [#tpu.dimension_semantics<parallel>, #tpu.dimension_semantics<parallel>, #tpu.dimension_semantics<arbitrary>], iteration_bounds = array<i64: 2, 1, 1>, scalar_prefetch = 0 : i64, scratch_operands = 3 : i64, tpu.core_type = #tpu.core_type<tc>, window_params = [{transform_indices = @transform_0, window_bounds = array<i64: 1, 1, 256>}, {transform_indices = @transform_1, window_bounds = array<i64: 1, 20, 256>}, {transform_indices = @transform_2, window_bounds = array<i64: 1, 1, 20, 1>}, {transform_indices = @transform_3, window_bounds = array<i64: 1, 1, 20, 1>}, {transform_indices = @transform_4, window_bounds = array<i64: 1, 1, 20, 1>}]} {
    %c0_i32 = arith.constant 0 : i32
    %0 = arith.cmpi eq, %arg2, %c0_i32 : i32
    %1 = arith.extui %0 : i1 to i32
    %c0_i32_0 = arith.constant 0 : i32
    %2 = arith.cmpi ne, %1, %c0_i32_0 : i32
    scf.if %2 {
      %cst_26 = arith.constant 0.000000e+00 : f32
      %43 = vector.broadcast %cst_26 : f32 to vector<20x1xf32>
      %c0_27 = arith.constant 0 : index
      %c0_28 = arith.constant 0 : index
      %44 = vector.load %arg8[%c0_27, %c0_28] : memref<20x1xf32, #tpu.memory_space<vmem>>, vector<20x1xf32>
      tpu.vector_store %arg8[%c0_27, %c0_28], %43 {strides = array<i32>} : memref<20x1xf32, #tpu.memory_space<vmem>>, vector<20x1xf32>,
      %cst_29 = arith.constant 0.000000e+00 : f32
      %45 = vector.broadcast %cst_29 : f32 to vector<20x1xf32>
      %c0_30 = arith.constant 0 : index
      %c0_31 = arith.constant 0 : index
      %46 = vector.load %arg9[%c0_30, %c0_31] : memref<20x1xf32, #tpu.memory_space<vmem>>, vector<20x1xf32>
      tpu.vector_store %arg9[%c0_30, %c0_31], %45 {strides = array<i32>} : memref<20x1xf32, #tpu.memory_space<vmem>>, vector<20x1xf32>,
      %cst_32 = arith.constant 0.000000e+00 : f32
      %47 = vector.broadcast %cst_32 : f32 to vector<20x1xf32>
      %c0_33 = arith.constant 0 : index
      %c0_34 = arith.constant 0 : index
      %48 = vector.load %arg10[%c0_33, %c0_34] : memref<20x1xf32, #tpu.memory_space<vmem>>, vector<20x1xf32>
      tpu.vector_store %arg10[%c0_33, %c0_34], %47 {strides = array<i32>} : memref<20x1xf32, #tpu.memory_space<vmem>>, vector<20x1xf32>,
    } else {
    }
    %c0 = arith.constant 0 : index
    %c0_1 = arith.constant 0 : index
    %c0_2 = arith.constant 0 : index
    %3 = vector.load %arg3[%c0, %c0_1, %c0_2] : memref<1x1x256xi16, #tpu.memory_space<vmem>>, vector<1x1x256xi16>
    %4 = vector.shape_cast %3 : vector<1x1x256xi16> to vector<1x256xi16>
    %5 = arith.extsi %4 : vector<1x256xi16> to vector<1x256xi32>
    %c255_i32 = arith.constant 255 : i32
    %6 = vector.broadcast %c255_i32 : i32 to vector<1x256xi32>
    %7 = arith.cmpi eq, %5, %6 : vector<1x256xi32>
    %c-1_i32 = arith.constant -1 : i32
    %8 = vector.broadcast %c-1_i32 : i32 to vector<1x256xi32>
    %9 = arith.select %7, %8, %5 : vector<1x256xi1>, vector<1x256xi32>
    %10 = tpu.iota {dimensions = array<i32: 0>} : vector<20x256xi32>
    %11 = vector.broadcast %9 : vector<1x256xi32> to vector<20x256xi32>
    %12 = arith.cmpi eq, %10, %11 : vector<20x256xi32>
    %cst = arith.constant 1.000000e+00 : f32
    %cst_3 = arith.constant 0.000000e+00 : f32
    %13 = vector.broadcast %cst : f32 to vector<20x256xf32>
    %14 = vector.broadcast %cst_3 : f32 to vector<20x256xf32>
    %15 = arith.select %12, %13, %14 : vector<20x256xi1>, vector<20x256xf32>
    %cst_4 = arith.constant dense<true> : vector<1x256xi1>
    %16 = arith.xori %7, %cst_4 : vector<1x256xi1>
    %17 = vector.shape_cast %16 : vector<1x256xi1> to vector<1x256xi1>
    %18 = vector.broadcast %17 : vector<1x256xi1> to vector<20x256xi1>
    %c0_5 = arith.constant 0 : index
    %c0_6 = arith.constant 0 : index
    %19 = vector.load %arg8[%c0_5, %c0_6] : memref<20x1xf32, #tpu.memory_space<vmem>>, vector<20x1xf32>
    %cst_7 = arith.constant dense<0.000000e+00> : vector<20xf32>
    %20 = vector.multi_reduction <add>, %15, %cst_7 [1] : vector<20x256xf32> to vector<20xf32>
    %21 = vector.shape_cast %20 : vector<20xf32> to vector<20x1xf32>
    %22 = arith.addf %19, %21 : vector<20x1xf32>
    %c0_8 = arith.constant 0 : index
    %c0_9 = arith.constant 0 : index
    %23 = vector.load %arg8[%c0_8, %c0_9] : memref<20x1xf32, #tpu.memory_space<vmem>>, vector<20x1xf32>
    tpu.vector_store %arg8[%c0_8, %c0_9], %22 {strides = array<i32>} : memref<20x1xf32, #tpu.memory_space<vmem>>, vector<20x1xf32>,
    %c0_10 = arith.constant 0 : index
    %c0_11 = arith.constant 0 : index
    %c0_12 = arith.constant 0 : index
    %24 = vector.load %arg4[%c0_10, %c0_11, %c0_12] : memref<1x20x256xbf16, #tpu.memory_space<vmem>>, vector<1x20x256xbf16>
    %25 = vector.shape_cast %24 : vector<1x20x256xbf16> to vector<20x256xbf16>
    %26 = arith.extf %25 : vector<20x256xbf16> to vector<20x256xf32>
    %cst_13 = arith.constant 0.000000e+00 : f32
    %27 = vector.broadcast %cst_13 : f32 to vector<20x256xf32>
    %28 = arith.select %18, %26, %27 : vector<20x256xi1>, vector<20x256xf32>
    %c0_14 = arith.constant 0 : index
    %c0_15 = arith.constant 0 : index
    %29 = vector.load %arg9[%c0_14, %c0_15] : memref<20x1xf32, #tpu.memory_space<vmem>>, vector<20x1xf32>
    %30 = arith.mulf %15, %28 : vector<20x256xf32>
    %cst_16 = arith.constant dense<0.000000e+00> : vector<20xf32>
    %31 = vector.multi_reduction <add>, %30, %cst_16 [1] : vector<20x256xf32> to vector<20xf32>
    %32 = vector.shape_cast %31 : vector<20xf32> to vector<20x1xf32>
    %33 = arith.addf %29, %32 : vector<20x1xf32>
    %c0_17 = arith.constant 0 : index
    %c0_18 = arith.constant 0 : index
    %34 = vector.load %arg9[%c0_17, %c0_18] : memref<20x1xf32, #tpu.memory_space<vmem>>, vector<20x1xf32>
    tpu.vector_store %arg9[%c0_17, %c0_18], %33 {strides = array<i32>} : memref<20x1xf32, #tpu.memory_space<vmem>>, vector<20x1xf32>,
    %c0_19 = arith.constant 0 : index
    %c0_20 = arith.constant 0 : index
    %35 = vector.load %arg10[%c0_19, %c0_20] : memref<20x1xf32, #tpu.memory_space<vmem>>, vector<20x1xf32>
    %cst_21 = arith.constant dense<0.000000e+00> : vector<20xf32>
    %36 = vector.multi_reduction <add>, %28, %cst_21 [1] : vector<20x256xf32> to vector<20xf32>
    %37 = vector.shape_cast %36 : vector<20xf32> to vector<20x1xf32>
    %38 = arith.addf %35, %37 : vector<20x1xf32>
    %c0_22 = arith.constant 0 : index
    %c0_23 = arith.constant 0 : index
    %39 = vector.load %arg10[%c0_22, %c0_23] : memref<20x1xf32, #tpu.memory_space<vmem>>, vector<20x1xf32>
    tpu.vector_store %arg10[%c0_22, %c0_23], %38 {strides = array<i32>} : memref<20x1xf32, #tpu.memory_space<vmem>>, vector<20x1xf32>,
    %c0_i32_24 = arith.constant 0 : i32
    %40 = arith.cmpi eq, %arg2, %c0_i32_24 : i32
    %41 = arith.extui %40 : i1 to i32
    %c0_i32_25 = arith.constant 0 : i32
    %42 = arith.cmpi ne, %41, %c0_i32_25 : i32
    scf.if %42 {
      %c0_26 = arith.constant 0 : index
      %c0_27 = arith.constant 0 : index
      %43 = vector.load %arg8[%c0_26, %c0_27] : memref<20x1xf32, #tpu.memory_space<vmem>>, vector<20x1xf32>
      %c0_28 = arith.constant 0 : index
      %c0_29 = arith.constant 0 : index
      %c0_30 = arith.constant 0 : index
      %c0_31 = arith.constant 0 : index
      %44 = vector.load %arg5[%c0_28, %c0_29, %c0_30, %c0_31] : memref<1x1x20x1xf32, #tpu.memory_space<vmem>>, vector<1x1x20x1xf32>
      %45 = vector.shape_cast %44 : vector<1x1x20x1xf32> to vector<20x1xf32>
      %46 = vector.shape_cast %43 : vector<20x1xf32> to vector<1x1x20x1xf32>
      tpu.vector_store %arg5[%c0_28, %c0_29, %c0_30, %c0_31], %46 {strides = array<i32>} : memref<1x1x20x1xf32, #tpu.memory_space<vmem>>, vector<1x1x20x1xf32>,
      %c0_32 = arith.constant 0 : index
      %c0_33 = arith.constant 0 : index
      %47 = vector.load %arg9[%c0_32, %c0_33] : memref<20x1xf32, #tpu.memory_space<vmem>>, vector<20x1xf32>
      %c0_34 = arith.constant 0 : index
      %c0_35 = arith.constant 0 : index
      %c0_36 = arith.constant 0 : index
      %c0_37 = arith.constant 0 : index
      %48 = vector.load %arg6[%c0_34, %c0_35, %c0_36, %c0_37] : memref<1x1x20x1xf32, #tpu.memory_space<vmem>>, vector<1x1x20x1xf32>
      %49 = vector.shape_cast %48 : vector<1x1x20x1xf32> to vector<20x1xf32>
      %50 = vector.shape_cast %47 : vector<20x1xf32> to vector<1x1x20x1xf32>
      tpu.vector_store %arg6[%c0_34, %c0_35, %c0_36, %c0_37], %50 {strides = array<i32>} : memref<1x1x20x1xf32, #tpu.memory_space<vmem>>, vector<1x1x20x1xf32>,
      %c0_38 = arith.constant 0 : index
      %c0_39 = arith.constant 0 : index
      %51 = vector.load %arg10[%c0_38, %c0_39] : memref<20x1xf32, #tpu.memory_space<vmem>>, vector<20x1xf32>
      %c0_40 = arith.constant 0 : index
      %c0_41 = arith.constant 0 : index
      %c0_42 = arith.constant 0 : index
      %c0_43 = arith.constant 0 : index
      %52 = vector.load %arg7[%c0_40, %c0_41, %c0_42, %c0_43] : memref<1x1x20x1xf32, #tpu.memory_space<vmem>>, vector<1x1x20x1xf32>
      %53 = vector.shape_cast %52 : vector<1x1x20x1xf32> to vector<20x1xf32>
      %54 = vector.shape_cast %51 : vector<20x1xf32> to vector<1x1x20x1xf32>
      tpu.vector_store %arg7[%c0_40, %c0_41, %c0_42, %c0_43], %54 {strides = array<i32>} : memref<1x1x20x1xf32, #tpu.memory_space<vmem>>, vector<1x1x20x1xf32>,
    } else {
    }
    return
  }
  func.func @transform_0(%arg0: i32, %arg1: i32, %arg2: i32) -> (i32, i32, i32) {
    %c1_i32 = arith.constant 1 : i32
    %0 = arith.muli %arg1, %c1_i32 : i32
    %1 = arith.addi %0, %arg2 : i32
    %c0_i32 = arith.constant 0 : i32
    %c0_i32_0 = arith.constant 0 : i32
    return %arg0, %c0_i32, %1 : i32, i32, i32
  }
  func.func @transform_1(%arg0: i32, %arg1: i32, %arg2: i32) -> (i32, i32, i32) {
    %c1_i32 = arith.constant 1 : i32
    %0 = arith.muli %arg1, %c1_i32 : i32
    %1 = arith.addi %0, %arg2 : i32
    %c0_i32 = arith.constant 0 : i32
    %c0_i32_0 = arith.constant 0 : i32
    return %arg0, %c0_i32, %1 : i32, i32, i32
  }
  func.func @transform_2(%arg0: i32, %arg1: i32, %arg2: i32) -> (i32, i32, i32, i32) {
    %c0_i32 = arith.constant 0 : i32
    %c0_i32_0 = arith.constant 0 : i32
    %c0_i32_1 = arith.constant 0 : i32
    return %arg0, %arg1, %c0_i32, %c0_i32_0 : i32, i32, i32, i32
  }
  func.func @transform_3(%arg0: i32, %arg1: i32, %arg2: i32) -> (i32, i32, i32, i32) {
    %c0_i32 = arith.constant 0 : i32
    %c0_i32_0 = arith.constant 0 : i32
    %c0_i32_1 = arith.constant 0 : i32
    return %arg0, %arg1, %c0_i32, %c0_i32_0 : i32, i32, i32, i32
  }
  func.func @transform_4(%arg0: i32, %arg1: i32, %arg2: i32) -> (i32, i32, i32, i32) {
    %c0_i32 = arith.constant 0 : i32
    %c0_i32_0 = arith.constant 0 : i32
    %c0_i32_1 = arith.constant 0 : i32
    return %arg0, %arg1, %c0_i32, %c0_i32_0 : i32, i32, i32, i32
  }
}

</mosaic_0001>

<llo_original>
// kernel: tpu_custom_call.1
$region0: #{tpu_custom_call.1}
  #allocation0 [shape = 'u32[]', space=smem, size = 0x4, offset = 0x4, fixed_abs, tag = 'smem constant byte address 0x4 - core index']
  #allocation1 [shape = 'u32[144,128]{1,0:T(1,128)}', space=vmem, size = 0x12000, scoped, tag = 'internal scratch']
  #allocation2 [shape = 'f32[20,1]{1,0:T(8,128)}', space=vmem, size = 0x3000, scoped, tag = 'scratch operand']
  #allocation3 [shape = 'f32[20,1]{1,0:T(8,128)}', space=vmem, size = 0x3000, scoped, tag = 'scratch operand']
  #allocation4 [shape = 'f32[20,1]{1,0:T(8,128)}', space=vmem, size = 0x3000, scoped, tag = 'scratch operand']
  %s0 = inlined_call_operand.vmem [shape: s16[2,1,256], index: 0, kind: input, shape index: {}]
  %s1 = inlined_call_operand.vmem [shape: bf16[2,20,256], index: 1, kind: input, shape index: {}]
  %s2 = inlined_call_operand.vmem [shape: f32[2,1,20,1], index: 2, kind: output, shape index: {0}]
  %s3 = inlined_call_operand.vmem [shape: f32[2,1,20,1], index: 3, kind: output, shape index: {1}]
  %s4 = inlined_call_operand.vmem [shape: f32[2,1,20,1], index: 4, kind: output, shape index: {2}]
  %5 = xla_tuple %s2, %s3, %s4
  %s6 = sld [smem:[#allocation0]]
  $region65: #{tpu_custom_call.1} parent=0
    _
  %s8 = ssub.s32 1, %s6
  %s9 = scalar_select 0, %s8, %s6
  loop: start=0, step=1, limit=4
  $region2: #{tpu_custom_call.1} parent=0 // loop_pre_header
    _
  $region3: #{tpu_custom_call.1} parent=0 // loop_header
    %s11 = sphi 0, %s15
    %p12 = scmp.ge.s32.totalorder %s11, 4
    %s18 = sphi 0, %s37
    %s19 = sphi 0, %s33
    %s20 = sphi 0, %s29
    %s21 = sphi 0, %s18
    %s22 = sphi 0, %s19
    %s23 = sphi 0, %s20
    %s24 = sphi 0, %s21
    %s25 = sphi 0, %s22
    %s26 = sphi 0, %s23
    %s44 = sphi 0, %s46
    %s47 = sphi 0, %s44
    %s48 = sphi 0, %s47
    %s64 = sphi 0, %s48
    %s74 = sphi 0, %s76
    %s77 = sphi 0, %s74
    %s78 = sphi 0, %s77
    %s94 = sphi 0, %s78
    %s102 = sphi 0, %s104
    %s105 = sphi 0, %s102
    %s106 = sphi 0, %s105
    %s122 = sphi 0, %s106
    %s130 = sphi 0, %s132
    %s133 = sphi 0, %s130
    %s134 = sphi 0, %s133
    %s150 = sphi 0, %s134
    %s158 = sphi 0, %s160
    %s161 = sphi 0, %s158
    %s162 = sphi 0, %s161
    %s178 = sphi 0, %s162
  $region4: #{tpu_custom_call.1} parent=0 // loop_header_branch
    %14 = sbr.rel (%p12) target = $region8
  $region5: #{tpu_custom_call.1} parent=0 // loop_body
    %s16 = ssub.s32 %s11, 1
    %s17 = ssub.s32 %s11, 2
    %s27 = sadd.s32 1, %s20
    %p28 = scmp.ge.s32.totalorder %s27, 1
    %s29 = scalar_select %p28, 0, %s27
    %s30 = sadd.s32 1, %s19
    %s31 = scalar_select %p28, %s30, %s19
    %p32 = scmp.ge.s32.totalorder %s31, 1
    %s33 = scalar_select %p32, 0, %s31
    %s34 = sadd.s32 1, %s18
    %s35 = scalar_select %p32, %s34, %s18
    %p36 = scmp.ge.s32.totalorder %s35, 2
    %s37 = scalar_select %p36, 0, %s35
    %s38 = sadd.s32 %s19, %s20
    %s39 = sadd.s32 %s33, %s29
    %s40 = ssub.s32 %s18, %s37
    %s41 = ssub.s32 %s38, %s39
    %s42 = sor.u32 %s40, %s41
    %p43 = scmp.eq.s32.totalorder %s42, 0
    %s45 = sadd.s32 %s44, 1
    %s46 = scalar_select %p43, %s44, %s45
    %p49 = pneg %p43
    %p50 = scmp.eq.s32.totalorder %s11, 1
    %p51 = por %p49, %p50
    %p52 = scmp.ne.s32.totalorder %s44, %s47
    %p53 = scmp.eq.s32.totalorder %s11, 0
    %p54 = por %p52, %p53
    %p55 = scmp.ne.s32.totalorder %s44, %s47
    %p56 = scmp.eq.s32.totalorder %s16, 1
    %p57 = por %p55, %p56
    %p58 = scmp.ne.s32.totalorder %s47, %s48
    %p59 = scmp.eq.s32.totalorder %s16, 0
    %p60 = por %p58, %p59
    %p61 = scmp.ne.s32.totalorder %s47, %s48
    %p62 = scmp.eq.s32.totalorder %s17, 1
    %p63 = por %p61, %p62
    %p65 = scmp.ne.s32.totalorder %s48, %s64
    %p66 = scmp.eq.s32.totalorder %s17, 0
    %p67 = por %p65, %p66
    %s68 = sadd.s32 %s19, %s20
    %s69 = sadd.s32 %s33, %s29
    %s70 = ssub.s32 %s18, %s37
    %s71 = ssub.s32 %s68, %s69
    %s72 = sor.u32 %s70, %s71
    %p73 = scmp.eq.s32.totalorder %s72, 0
    %s75 = sadd.s32 %s74, 1
    %s76 = scalar_select %p73, %s74, %s75
    %p79 = pneg %p73
    %p80 = scmp.eq.s32.totalorder %s11, 1
    %p81 = por %p79, %p80
    %p82 = scmp.ne.s32.totalorder %s74, %s77
    %p83 = scmp.eq.s32.totalorder %s11, 0
    %p84 = por %p82, %p83
    %p85 = scmp.ne.s32.totalorder %s74, %s77
    %p86 = scmp.eq.s32.totalorder %s16, 1
    %p87 = por %p85, %p86
    %p88 = scmp.ne.s32.totalorder %s77, %s78
    %p89 = scmp.eq.s32.totalorder %s16, 0
    %p90 = por %p88, %p89
    %p91 = scmp.ne.s32.totalorder %s77, %s78
    %p92 = scmp.eq.s32.totalorder %s17, 1
    %p93 = por %p91, %p92
    %p95 = scmp.ne.s32.totalorder %s78, %s94
    %p96 = scmp.eq.s32.totalorder %s17, 0
    %p97 = por %p95, %p96
    %s98 = ssub.s32 %s18, %s37
    %s99 = ssub.s32 %s19, %s33
    %s100 = sor.u32 %s98, %s99
    %p101 = scmp.eq.s32.totalorder %s100, 0
    %s103 = sadd.s32 %s102, 1
    %s104 = scalar_select %p101, %s102, %s103
    %p107 = pneg %p101
    %p108 = scmp.eq.s32.totalorder %s11, 1
    %p109 = por %p107, %p108
    %p110 = scmp.ne.s32.totalorder %s102, %s105
    %p111 = scmp.eq.s32.totalorder %s11, 0
    %p112 = por %p110, %p111
    %p113 = scmp.ne.s32.totalorder %s102, %s105
    %p114 = scmp.eq.s32.totalorder %s16, 1
    %p115 = por %p113, %p114
    %p116 = scmp.ne.s32.totalorder %s105, %s106
    %p117 = scmp.eq.s32.totalorder %s16, 0
    %p118 = por %p116, %p117
    %p119 = scmp.ne.s32.totalorder %s105, %s106
    %p120 = scmp.eq.s32.totalorder %s17, 1
    %p121 = por %p119, %p120
    %p123 = scmp.ne.s32.totalorder %s106, %s122
    %p124 = scmp.eq.s32.totalorder %s17, 0
    %p125 = por %p123, %p124
    %s126 = ssub.s32 %s18, %s37
    %s127 = ssub.s32 %s19, %s33
    %s128 = sor.u32 %s126, %s127
    %p129 = scmp.eq.s32.totalorder %s128, 0
    %s131 = sadd.s32 %s130, 1
    %s132 = scalar_select %p129, %s130, %s131
    %p135 = pneg %p129
    %p136 = scmp.eq.s32.totalorder %s11, 1
    %p137 = por %p135, %p136
    %p138 = scmp.ne.s32.totalorder %s130, %s133
    %p139 = scmp.eq.s32.totalorder %s11, 0
    %p140 = por %p138, %p139
    %p141 = scmp.ne.s32.totalorder %s130, %s133
    %p142 = scmp.eq.s32.totalorder %s16, 1
    %p143 = por %p141, %p142
    %p144 = scmp.ne.s32.totalorder %s133, %s134
    %p145 = scmp.eq.s32.totalorder %s16, 0
    %p146 = por %p144, %p145
    %p147 = scmp.ne.s32.totalorder %s133, %s134
    %p148 = scmp.eq.s32.totalorder %s17, 1
    %p149 = por %p147, %p148
    %p151 = scmp.ne.s32.totalorder %s134, %s150
    %p152 = scmp.eq.s32.totalorder %s17, 0
    %p153 = por %p151, %p152
    %s154 = ssub.s32 %s18, %s37
    %s155 = ssub.s32 %s19, %s33
    %s156 = sor.u32 %s154, %s155
    %p157 = scmp.eq.s32.totalorder %s156, 0
    %s159 = sadd.s32 %s158, 1
    %s160 = scalar_select %p157, %s158, %s159
    %p163 = pneg %p157
    %p164 = scmp.eq.s32.totalorder %s11, 1
    %p165 = por %p163, %p164
    %p166 = scmp.ne.s32.totalorder %s158, %s161
    %p167 = scmp.eq.s32.totalorder %s11, 0
    %p168 = por %p166, %p167
    %p169 = scmp.ne.s32.totalorder %s158, %s161
    %p170 = scmp.eq.s32.totalorder %s16, 1
    %p171 = por %p169, %p170
    %p172 = scmp.ne.s32.totalorder %s161, %s162
    %p173 = scmp.eq.s32.totalorder %s16, 0
    %p174 = por %p172, %p173
    %p175 = scmp.ne.s32.totalorder %s161, %s162
    %p176 = scmp.eq.s32.totalorder %s17, 1
    %p177 = por %p175, %p176
    %p179 = scmp.ne.s32.totalorder %s162, %s178
    %p180 = scmp.eq.s32.totalorder %s17, 0
    %p181 = por %p179, %p180
    %p182 = scmp.le.s32.totalorder 1, %s11
    %p183 = scmp.lt.s32.totalorder %s11, 3
    %p184 = pnand %p182, %p183
    %p185 = pneg %p184
    // Predicated region
    $region9: #{tpu_custom_call.1} parent=5 // pred_check
      _
    $region10: #{tpu_custom_call.1} parent=5 // pred_check_branch
      %187 = sbr.rel (%p184) target = $region12
    $region11: #{tpu_custom_call.1} parent=5 // pred_region
      %s188 = ssub.s32 %s11, 1
    $region12: #{tpu_custom_call.1} parent=5 // pred_fallthru
      _
    %p189 = scmp.lt.s32.totalorder %s11, 2
    // Predicated region
    $region13: #{tpu_custom_call.1} parent=5 // pred_check
      %p190 = pneg %p189
    $region14: #{tpu_custom_call.1} parent=5 // pred_check_branch
      %192 = sbr.rel (%p190) target = $region16
    $region15: #{tpu_custom_call.1} parent=5 // pred_region
      // Predicated region
      $region17: #{tpu_custom_call.1} parent=15 // pred_check
        %p193 = pneg %p54
      $region18: #{tpu_custom_call.1} parent=15 // pred_check_branch
        %195 = sbr.rel (%p193) target = $region20
      $region19: #{tpu_custom_call.1} parent=15 // pred_region
        %s196 = sadd.s32 %s19, %s20
        %s197 = smul.u32 2, %s196
        %p198 = scmp.lt.s32.totalorder %s18, 1
        %s199 = scalar_select %p198, %s18, 1
        %p200 = scmp.lt.s32.totalorder %s197, 1
        %s201 = scalar_select %p200, %s197, 1
        %s202 = smul.addr %s199, 2
        %s203 = sadd.s32 %s201, %s202
        %s204 = scalar_lea.vmem %s0, %s203
        %s205 = sadd.s32 %s19, %s20
        %s206 = smul.u32 2, %s205
      $region20: #{tpu_custom_call.1} parent=15 // pred_fallthru
        _
      // Predicated region
      $region21: #{tpu_custom_call.1} parent=15 // pred_check
        %p207 = pneg %p84
      $region22: #{tpu_custom_call.1} parent=15 // pred_check_branch
        %209 = sbr.rel (%p207) target = $region24
      $region23: #{tpu_custom_call.1} parent=15 // pred_region
        %s210 = sadd.s32 %s19, %s20
        %s211 = smul.u32 2, %s210
        %p212 = scmp.lt.s32.totalorder %s18, 1
        %s213 = scalar_select %p212, %s18, 1
        %p214 = scmp.lt.s32.totalorder %s211, 1
        %s215 = scalar_select %p214, %s211, 1
        %s216 = smul.addr %s213, 6
        %s217 = sadd.s32 %s215, %s216
        %s218 = smul.addr %s217, 4
        %s219 = scalar_lea.vmem %s1, %s218
        %s220 = sadd.s32 %s19, %s20
        %s221 = smul.u32 2, %s220
      $region24: #{tpu_custom_call.1} parent=15 // pred_fallthru
        _
    $region16: #{tpu_custom_call.1} parent=5 // pred_fallthru
      _
    %p222 = scmp.le.s32.totalorder 1, %s11
    %p223 = scmp.lt.s32.totalorder %s11, 3
    %p224 = pnand %p222, %p223
    %p225 = pneg %p224
    // Predicated region
    $region25: #{tpu_custom_call.1} parent=5 // pred_check
      _
    $region26: #{tpu_custom_call.1} parent=5 // pred_check_branch
      %227 = sbr.rel (%p224) target = $region28
    $region27: #{tpu_custom_call.1} parent=5 // pred_region
      %s228 = ssub.s32 %s11, 1
      %s229 = sadd.s32 %s22, %s23
      %s230 = smul.u32 2, %s229
      %p231 = scmp.lt.s32.totalorder %s21, 1
      %s232 = scalar_select %p231, %s21, 1
      %p233 = scmp.lt.s32.totalorder %s230, 1
      %s234 = scalar_select %p233, %s230, 1
      %s235 = smul.addr %s232, 2
      %s236 = sadd.s32 %s234, %s235
      %s237 = scalar_lea.vmem %s0, %s236
      %p238 = pneg %p60
      %p239 = pneg %p57
      %s240 = sadd.s32 %s22, %s23
      %s241 = smul.u32 2, %s240
      %p242 = scmp.lt.s32.totalorder %s21, 1
      %s243 = scalar_select %p242, %s21, 1
      %p244 = scmp.lt.s32.totalorder %s241, 1
      %s245 = scalar_select %p244, %s241, 1
      %s246 = smul.addr %s243, 6
      %s247 = sadd.s32 %s245, %s246
      %s248 = smul.addr %s247, 4
      %s249 = scalar_lea.vmem %s1, %s248
      %p250 = pneg %p90
      %p251 = pneg %p87
      %p252 = pneg %p118
      %p253 = pneg %p115
      %p254 = scmp.lt.s32.totalorder %s21, 1
      %s255 = scalar_select %p254, %s21, 1
      %p256 = scmp.lt.s32.totalorder %s22, 0
      %s257 = scalar_select %p256, %s22, 0
      %s258 = smul.addr %s257, 3
      %s259 = smul.addr %s255, 3
      %s260 = sadd.s32 %s258, %s259
      %s261 = smul.addr %s260, 8
      %s262 = scalar_lea.vmem %s2, %s261
      %p263 = pneg %p146
      %p264 = pneg %p143
      %p265 = scmp.lt.s32.totalorder %s21, 1
      %s266 = scalar_select %p265, %s21, 1
      %p267 = scmp.lt.s32.totalorder %s22, 0
      %s268 = scalar_select %p267, %s22, 0
      %s269 = smul.addr %s268, 3
      %s270 = smul.addr %s266, 3
      %s271 = sadd.s32 %s269, %s270
      %s272 = smul.addr %s271, 8
      %s273 = scalar_lea.vmem %s3, %s272
      %p274 = pneg %p174
      %p275 = pneg %p171
      %p276 = scmp.lt.s32.totalorder %s21, 1
      %s277 = scalar_select %p276, %s21, 1
      %p278 = scmp.lt.s32.totalorder %s22, 0
      %s279 = scalar_select %p278, %s22, 0
      %s280 = smul.addr %s279, 3
      %s281 = smul.addr %s277, 3
      %s282 = sadd.s32 %s280, %s281
      %s283 = smul.addr %s282, 8
      %s284 = scalar_lea.vmem %s4, %s283
      %s285 = sadd.s32 %s22, %s23
      %s286 = smul.u32 2, %s285
      %p287 = scmp.lt.s32.totalorder %s21, 1
      %s288 = scalar_select %p287, %s21, 1
      %p289 = scmp.lt.s32.totalorder %s286, 1
      %s290 = scalar_select %p289, %s286, 1
      %s291 = smul.addr %s288, 2
      %s292 = sadd.s32 %s290, %s291
      %s293 = scalar_lea.vmem %s0, %s292
      %s294 = sadd.s32 %s22, %s23
      %s295 = smul.u32 2, %s294
      %s296 = sadd.s32 %s22, %s23
      %s297 = smul.u32 2, %s296
      %p298 = scmp.lt.s32.totalorder %s21, 1
      %s299 = scalar_select %p298, %s21, 1
      %p300 = scmp.lt.s32.totalorder %s297, 1
      %s301 = scalar_select %p300, %s297, 1
      %s302 = smul.addr %s299, 6
      %s303 = sadd.s32 %s301, %s302
      %s304 = smul.addr %s303, 4
      %s305 = scalar_lea.vmem %s1, %s304
      %s306 = sadd.s32 %s22, %s23
      %s307 = smul.u32 2, %s306
      %p308 = scmp.lt.s32.totalorder %s21, 1
      %s309 = scalar_select %p308, %s21, 1
      %p310 = scmp.lt.s32.totalorder %s22, 0
      %s311 = scalar_select %p310, %s22, 0
      %s312 = smul.addr %s311, 3
      %s313 = smul.addr %s309, 3
      %s314 = sadd.s32 %s312, %s313
      %s315 = smul.addr %s314, 8
      %s316 = scalar_lea.vmem %s2, %s315
      %p317 = scmp.lt.s32.totalorder %s21, 1
      %s318 = scalar_select %p317, %s21, 1
      %p319 = scmp.lt.s32.totalorder %s22, 0
      %s320 = scalar_select %p319, %s22, 0
      %s321 = smul.addr %s320, 3
      %s322 = smul.addr %s318, 3
      %s323 = sadd.s32 %s321, %s322
      %s324 = smul.addr %s323, 8
      %s325 = scalar_lea.vmem %s3, %s324
      %p326 = scmp.lt.s32.totalorder %s21, 1
      %s327 = scalar_select %p326, %s21, 1
      %p328 = scmp.lt.s32.totalorder %s22, 0
      %s329 = scalar_select %p328, %s22, 0
      %s330 = smul.addr %s329, 3
      %s331 = smul.addr %s327, 3
      %s332 = sadd.s32 %s330, %s331
      %s333 = smul.addr %s332, 8
      %s334 = scalar_lea.vmem %s4, %s333
      %p335 = scmp.eq.s32.totalorder %s23, 0
      // Predicated region
      $region29: #{tpu_custom_call.1} parent=27 // pred_check
        %p336 = pneg %p335
      $region30: #{tpu_custom_call.1} parent=27 // pred_check_branch
        %338 = sbr.rel (%p336) target = $region32
      $region31: #{tpu_custom_call.1} parent=27 // pred_region
        %vm339 = vcmask 7168
        %340 = vst.msk [vmem:[#allocation2] sm:$0xff] %vm339, 0.0
        %341 = vst.msk [vmem:[#allocation2 + $0x8] sm:$0xff] %vm339, 0.0
        %vm342 = vcmask 3072
        %343 = vst.msk [vmem:[#allocation2 + $0x10] sm:$0xf] %vm342, 0.0
        %344 = vst.msk [vmem:[#allocation3] sm:$0xff] %vm339, 0.0
        %345 = vst.msk [vmem:[#allocation3 + $0x8] sm:$0xff] %vm339, 0.0
        %346 = vst.msk [vmem:[#allocation3 + $0x10] sm:$0xf] %vm342, 0.0
        %347 = vst.msk [vmem:[#allocation4] sm:$0xff] %vm339, 0.0
        %348 = vst.msk [vmem:[#allocation4 + $0x8] sm:$0xff] %vm339, 0.0
        %349 = vst.msk [vmem:[#allocation4 + $0x10] sm:$0xf] %vm342, 0.0
      $region32: #{tpu_custom_call.1} parent=27 // pred_fallthru
        _
      %v350 = vld [vmem:[%s293] sm:$0x3]
      %v351 = vunpack.c.l.b16 %v350
      %vm352 = vcmp.eq.s32.totalorder %v351, 255
      %v353 = vsel %vm352, 4294967295, %v351
      %v354 = vlaneseq
      %v355 = vshrl.u32 %v354, 7
      %v356 = vadd.s32 %v355, 8
      %v357 = vadd.s32 %v355, 16
      %v358 = vlaneseq
      %v359 = vshrl.u32 %v358, 7
      %v360 = vsub.s32 0, %v359
      %v361 = vrot.slane %v353, %v360
      %v362 = vlaneseq
      %v363 = vshrl.u32 %v362, 7
      %v364 = vsub.s32 2, %v363
      %v365 = vrot.slane %v353, %v364
      %v366 = vlaneseq
      %v367 = vshrl.u32 %v366, 7
      %v368 = vsub.s32 0, %v367
      %v369 = vrot.slane %v361, %v368
      %v370 = vlaneseq
      %v371 = vshrl.u32 %v370, 7
      %v372 = vsub.s32 0, %v371
      %v373 = vrot.slane %v365, %v372
      %vm374 = vcmp.eq.s32.totalorder %v355, %v369
      %vm375 = vcmp.eq.s32.totalorder %v355, %v373
      %vm376 = vcmp.eq.s32.totalorder %v356, %v369
      %vm377 = vcmp.eq.s32.totalorder %v356, %v373
      %vm378 = vcmp.eq.s32.totalorder %v357, %v369
      %vm379 = vcmp.eq.s32.totalorder %v357, %v373
      %v380 = vsel %vm374, 1.0, 0.0
      %v381 = vsel %vm375, 1.0, 0.0
      %v382 = vsel %vm376, 1.0, 0.0
      %v383 = vsel %vm377, 1.0, 0.0
      %v384 = vsel %vm378, 1.0, 0.0
      %v385 = vsel %vm379, 1.0, 0.0
      %vm386 = vmxor %vm352, 1
      %v387 = vsel %vm386, 1, 0
      %v388 = vlaneseq
      %v389 = vshrl.u32 %v388, 7
      %v390 = vsub.s32 0, %v389
      %v391 = vrot.slane %v387, %v390
      %v392 = vlaneseq
      %v393 = vshrl.u32 %v392, 7
      %v394 = vsub.s32 2, %v393
      %v395 = vrot.slane %v387, %v394
      %v396 = vlaneseq
      %v397 = vshrl.u32 %v396, 7
      %v398 = vsub.s32 0, %v397
      %v399 = vrot.slane %v391, %v398
      %v400 = vlaneseq
      %v401 = vshrl.u32 %v400, 7
      %v402 = vsub.s32 0, %v401
      %v403 = vrot.slane %v395, %v402
      %vm404 = vcmp.eq.s32.totalorder %v399, 1
      %vm405 = vcmp.eq.s32.totalorder %v403, 1
      %v406 = vld [vmem:[#allocation2] sm:$0xff]
      %v407 = vld [vmem:[#allocation2 + $0x8] sm:$0xff]
      %v408 = vld [vmem:[#allocation2 + $0x10] sm:$0xf]
      %v409 = vadd.f32 %v380, %v381
      %410 = vadd.xlane.f32.xlu0 %v409
      %v411 = vpop.xlane.xlu0 %410
      %v412 = vadd.f32 %v382, %v383
      %413 = vadd.xlane.f32.xlu0 %v412
      %v414 = vpop.xlane.xlu0 %413
      %vm415 = vcmask 1043456
      %v416 = vsel %vm415, %v384, 0.0
      %v417 = vsel %vm415, %v385, 0.0
      %v418 = vadd.f32 %v416, %v417
      %419 = vadd.xlane.f32.xlu0 %v418
      %v420 = vpop.xlane.xlu0 %419
      %v421 = vadd.f32 %v406, %v411
      %v422 = vadd.f32 %v407, %v414
      %v423 = vadd.f32 %v408, %v420
      %vm424 = vcmask 7168
      %425 = vst.msk [vmem:[#allocation2] sm:$0xff] %vm424, %v421
      %426 = vst.msk [vmem:[#allocation2 + $0x8] sm:$0xff] %vm424, %v422
      %vm427 = vcmask 3072
      %428 = vst.msk [vmem:[#allocation2 + $0x10] sm:$0xf] %vm427, %v423
      %v429 = vld [vmem:[%s305] sm:$0xff]
      %v430 = vld [vmem:[%s305 + $0x8] sm:$0xff]
      %v431 = vld [vmem:[%s305 + $0x10] sm:$0x33]
      %v432 = vunpack.c.l.bf16 %v429
      %v433 = vunpack.c.h.bf16 %v429
      %v434 = vunpack.c.l.bf16 %v430
      %v435 = vunpack.c.h.bf16 %v430
      %v436 = vunpack.c.l.bf16 %v431
      %v437 = vunpack.c.h.bf16 %v431
      %v438 = vsel %vm404, %v432, 0.0
      %v439 = vsel %vm405, %v433, 0.0
      %v440 = vsel %vm404, %v434, 0.0
      %v441 = vsel %vm405, %v435, 0.0
      %v442 = vsel %vm404, %v436, 0.0
      %v443 = vsel %vm405, %v437, 0.0
      %v444 = vld [vmem:[#allocation3] sm:$0xff]
      %v445 = vld [vmem:[#allocation3 + $0x8] sm:$0xff]
      %v446 = vld [vmem:[#allocation3 + $0x10] sm:$0xf]
      %v447 = vmul.f32 %v380, %v438
      %v448 = vmul.f32 %v381, %v439
      %v449 = vmul.f32 %v382, %v440
      %v450 = vmul.f32 %v383, %v441
      %v451 = vmul.f32 %v384, %v442
      %v452 = vmul.f32 %v385, %v443
      %v453 = vadd.f32 %v447, %v448
      %454 = vadd.xlane.f32.xlu0 %v453
      %v455 = vpop.xlane.xlu0 %454
      %v456 = vadd.f32 %v449, %v450
      %457 = vadd.xlane.f32.xlu0 %v456
      %v458 = vpop.xlane.xlu0 %457
      %v459 = vsel %vm415, %v451, 0.0
      %v460 = vsel %vm415, %v452, 0.0
      %v461 = vadd.f32 %v459, %v460
      %462 = vadd.xlane.f32.xlu0 %v461
      %v463 = vpop.xlane.xlu0 %462
      %v464 = vadd.f32 %v444, %v455
      %v465 = vadd.f32 %v445, %v458
      %v466 = vadd.f32 %v446, %v463
      %467 = vst.msk [vmem:[#allocation3] sm:$0xff] %vm424, %v464
      %468 = vst.msk [vmem:[#allocation3 + $0x8] sm:$0xff] %vm424, %v465
      %469 = vst.msk [vmem:[#allocation3 + $0x10] sm:$0xf] %vm427, %v466
      %v470 = vld [vmem:[#allocation4] sm:$0xff]
      %v471 = vld [vmem:[#allocation4 + $0x8] sm:$0xff]
      %v472 = vld [vmem:[#allocation4 + $0x10] sm:$0xf]
      %v473 = vadd.f32 %v438, %v439
      %474 = vadd.xlane.f32.xlu0 %v473
      %v475 = vpop.xlane.xlu0 %474
      %v476 = vadd.f32 %v440, %v441
      %477 = vadd.xlane.f32.xlu0 %v476
      %v478 = vpop.xlane.xlu0 %477
      %v479 = vsel %vm415, %v442, 0.0
      %v480 = vsel %vm415, %v443, 0.0
      %v481 = vadd.f32 %v479, %v480
      %482 = vadd.xlane.f32.xlu0 %v481
      %v483 = vpop.xlane.xlu0 %482
      %v484 = vadd.f32 %v470, %v475
      %v485 = vadd.f32 %v471, %v478
      %v486 = vadd.f32 %v472, %v483
      %487 = vst.msk [vmem:[#allocation4] sm:$0xff] %vm424, %v484
      %488 = vst.msk [vmem:[#allocation4 + $0x8] sm:$0xff] %vm424, %v485
      %489 = vst.msk [vmem:[#allocation4 + $0x10] sm:$0xf] %vm427, %v486
      // Predicated region
      $region33: #{tpu_custom_call.1} parent=27 // pred_check
        %p490 = pneg %p335
      $region34: #{tpu_custom_call.1} parent=27 // pred_check_branch
        %492 = sbr.rel (%p490) target = $region36
      $region35: #{tpu_custom_call.1} parent=27 // pred_region
        %v493 = vld [vmem:[#allocation2] sm:$0xff]
        %v494 = vld [vmem:[#allocation2 + $0x8] sm:$0xff]
        %v495 = vld [vmem:[#allocation2 + $0x10] sm:$0xf]
        %496 = vst.msk [vmem:[%s316] sm:$0xff] %vm424, %v493
        %497 = vst.msk [vmem:[%s316 + $0x8] sm:$0xff] %vm424, %v494
        %498 = vst.msk [vmem:[%s316 + $0x10] sm:$0xf] %vm427, %v495
        %v499 = vld [vmem:[#allocation3] sm:$0xff]
        %v500 = vld [vmem:[#allocation3 + $0x8] sm:$0xff]
        %v501 = vld [vmem:[#allocation3 + $0x10] sm:$0xf]
        %502 = vst.msk [vmem:[%s325] sm:$0xff] %vm424, %v499
        %503 = vst.msk [vmem:[%s325 + $0x8] sm:$0xff] %vm424, %v500
        %504 = vst.msk [vmem:[%s325 + $0x10] sm:$0xf] %vm427, %v501
        %v505 = vld [vmem:[#allocation4] sm:$0xff]
        %v506 = vld [vmem:[#allocation4 + $0x8] sm:$0xff]
        %v507 = vld [vmem:[#allocation4 + $0x10] sm:$0xf]
        %508 = vst.msk [vmem:[%s334] sm:$0xff] %vm424, %v505
        %509 = vst.msk [vmem:[%s334 + $0x8] sm:$0xff] %vm424, %v506
        %510 = vst.msk [vmem:[%s334 + $0x10] sm:$0xf] %vm427, %v507
      $region36: #{tpu_custom_call.1} parent=27 // pred_fallthru
        _
      %p511 = scmp.lt.s32.totalorder %s21, 1
      %s512 = scalar_select %p511, %s21, 1
      %p513 = scmp.lt.s32.totalorder %s22, 0
      %s514 = scalar_select %p513, %s22, 0
      %s515 = smul.addr %s514, 3
      %s516 = smul.addr %s512, 3
      %s517 = sadd.s32 %s515, %s516
      %s518 = smul.addr %s517, 8
      %s519 = scalar_lea.vmem %s2, %s518
      %p520 = scmp.lt.s32.totalorder %s21, 1
      %s521 = scalar_select %p520, %s21, 1
      %p522 = scmp.lt.s32.totalorder %s22, 0
      %s523 = scalar_select %p522, %s22, 0
      %s524 = smul.addr %s523, 3
      %s525 = smul.addr %s521, 3
      %s526 = sadd.s32 %s524, %s525
      %s527 = smul.addr %s526, 8
      %s528 = scalar_lea.vmem %s3, %s527
      %p529 = scmp.lt.s32.totalorder %s21, 1
      %s530 = scalar_select %p529, %s21, 1
      %p531 = scmp.lt.s32.totalorder %s22, 0
      %s532 = scalar_select %p531, %s22, 0
      %s533 = smul.addr %s532, 3
      %s534 = smul.addr %s530, 3
      %s535 = sadd.s32 %s533, %s534
      %s536 = smul.addr %s535, 8
      %s537 = scalar_lea.vmem %s4, %s536
      // Predicated region
      $region37: #{tpu_custom_call.1} parent=27 // pred_check
        %p538 = pneg %p115
      $region38: #{tpu_custom_call.1} parent=27 // pred_check_branch
        %540 = sbr.rel (%p538) target = $region40
      $region39: #{tpu_custom_call.1} parent=27 // pred_region
        _
      $region40: #{tpu_custom_call.1} parent=27 // pred_fallthru
        _
      // Predicated region
      $region41: #{tpu_custom_call.1} parent=27 // pred_check
        %p541 = pneg %p143
      $region42: #{tpu_custom_call.1} parent=27 // pred_check_branch
        %543 = sbr.rel (%p541) target = $region44
      $region43: #{tpu_custom_call.1} parent=27 // pred_region
        _
      $region44: #{tpu_custom_call.1} parent=27 // pred_fallthru
        _
      // Predicated region
      $region45: #{tpu_custom_call.1} parent=27 // pred_check
        %p544 = pneg %p171
      $region46: #{tpu_custom_call.1} parent=27 // pred_check_branch
        %546 = sbr.rel (%p544) target = $region48
      $region47: #{tpu_custom_call.1} parent=27 // pred_region
        _
      $region48: #{tpu_custom_call.1} parent=27 // pred_fallthru
        _
    $region28: #{tpu_custom_call.1} parent=5 // pred_fallthru
      _
    %p547 = scmp.le.s32.totalorder 2, %s11
    // Predicated region
    $region49: #{tpu_custom_call.1} parent=5 // pred_check
      %p548 = pneg %p547
    $region50: #{tpu_custom_call.1} parent=5 // pred_check_branch
      %550 = sbr.rel (%p548) target = $region52
    $region51: #{tpu_custom_call.1} parent=5 // pred_region
      %s551 = ssub.s32 %s11, 2
      // Predicated region
      $region53: #{tpu_custom_call.1} parent=51 // pred_check
        %p552 = pneg %p121
      $region54: #{tpu_custom_call.1} parent=51 // pred_check_branch
        %554 = sbr.rel (%p552) target = $region56
      $region55: #{tpu_custom_call.1} parent=51 // pred_region
        %p555 = scmp.lt.s32.totalorder %s24, 1
        %s556 = scalar_select %p555, %s24, 1
        %p557 = scmp.lt.s32.totalorder %s25, 0
        %s558 = scalar_select %p557, %s25, 0
        %s559 = smul.addr %s558, 3
        %s560 = smul.addr %s556, 3
        %s561 = sadd.s32 %s559, %s560
        %s562 = smul.addr %s561, 8
        %s563 = scalar_lea.vmem %s2, %s562
      $region56: #{tpu_custom_call.1} parent=51 // pred_fallthru
        _
      // Predicated region
      $region57: #{tpu_custom_call.1} parent=51 // pred_check
        %p564 = pneg %p149
      $region58: #{tpu_custom_call.1} parent=51 // pred_check_branch
        %566 = sbr.rel (%p564) target = $region60
      $region59: #{tpu_custom_call.1} parent=51 // pred_region
        %p567 = scmp.lt.s32.totalorder %s24, 1
        %s568 = scalar_select %p567, %s24, 1
        %p569 = scmp.lt.s32.totalorder %s25, 0
        %s570 = scalar_select %p569, %s25, 0
        %s571 = smul.addr %s570, 3
        %s572 = smul.addr %s568, 3
        %s573 = sadd.s32 %s571, %s572
        %s574 = smul.addr %s573, 8
        %s575 = scalar_lea.vmem %s3, %s574
      $region60: #{tpu_custom_call.1} parent=51 // pred_fallthru
        _
      // Predicated region
      $region61: #{tpu_custom_call.1} parent=51 // pred_check
        %p576 = pneg %p177
      $region62: #{tpu_custom_call.1} parent=51 // pred_check_branch
        %578 = sbr.rel (%p576) target = $region64
      $region63: #{tpu_custom_call.1} parent=51 // pred_region
        %p579 = scmp.lt.s32.totalorder %s24, 1
        %s580 = scalar_select %p579, %s24, 1
        %p581 = scmp.lt.s32.totalorder %s25, 0
        %s582 = scalar_select %p581, %s25, 0
        %s583 = smul.addr %s582, 3
        %s584 = smul.addr %s580, 3
        %s585 = sadd.s32 %s583, %s584
        %s586 = smul.addr %s585, 8
        %s587 = scalar_lea.vmem %s4, %s586
      $region64: #{tpu_custom_call.1} parent=51 // pred_fallthru
        _
    $region52: #{tpu_custom_call.1} parent=5 // pred_fallthru
      _
  $region6: #{tpu_custom_call.1} parent=0 // loop_footer
    %s15 = sadd.s32 1, %s11
  $region7: #{tpu_custom_call.1} parent=0 // loop_footer_branch
    %10 = sbr.rel target = $region3
  $region8: #{tpu_custom_call.1} parent=0 // loop_exit
    _

</llo_original>
